<compile_context>
chip_gen: v7x
topology: tpu7x:2x2x1
jax: 0.10.0
libtpu: 0.0.40
codegen_flags: <defaults>
</compile_context>

<pallas_src>
import math

import jax
import jax.numpy as jnp
from jax.experimental import pallas as pl
from jax.experimental.pallas import tpu as pltpu


def _copy_kernel(x_ref, o_ref):
    # Pure lane-dense materialization copy; the flatten itself is an index
    # remap handled by (zero-copy) wrapper reshapes.
    o_ref[...] = x_ref[...]


def _materialize_copy(x2):
    """Stream a (N, D) array through VMEM to produce a fresh output buffer."""
    n, d = x2.shape
    total = n * d
    itemsize = jnp.dtype(x2.dtype).itemsize
    sublane = max(8, 32 // itemsize)          # 8 f32 / 16 bf16 / 32 int8

    # Re-view the flat buffer with a lane-dense last dim (multiple of 128).
    lane = 0
    for cand in (2048, 1024, 512, 256, 128):
        if total % cand == 0:
            lane = cand
            break

    if lane == 0:
        # total not a multiple of 128: small-shape fallback, single full-array
        # block (block == full dims, so the (8,128) rule is satisfied).
        return pl.pallas_call(
            _copy_kernel,
            out_shape=jax.ShapeDtypeStruct((n, d), x2.dtype),
        )(x2)

    rows = total // lane
    xf = x2.reshape(rows, lane)               # metadata-only re-view
    row_bytes = lane * itemsize
    target_bytes = 2 << 20                    # ~2 MiB blocks (v5e-safe)

    if rows <= sublane:
        # Single block equal to the full array dims: legal and already one
        # large lane-dense DMA -- no point splitting (megacore gains nothing
        # on sub-MiB tensors).
        bt = rows
    else:
        bt = max(sublane, (target_bytes // row_bytes) // sublane * sublane)
        bt = min(bt, (rows // sublane) * sublane)

    grid = pl.cdiv(rows, bt)
    out_flat = pl.pallas_call(
        _copy_kernel,
        out_shape=jax.ShapeDtypeStruct((rows, lane), x2.dtype),
        grid=(grid,),
        in_specs=[pl.BlockSpec((bt, lane), lambda i: (i, 0))],
        out_specs=pl.BlockSpec((bt, lane), lambda i: (i, 0)),
        compiler_params=pltpu.CompilerParams(
            dimension_semantics=("parallel",)),
    )(xf)
    return out_flat.reshape(n, d)             # metadata-only re-view


def flatten(x, materialize=False):
    """Pallas equivalent of torch's `x.view(x.size(0), -1)`.

    Default: metadata-only reshape (exactly .view, zero HBM traffic).
    materialize=True: additionally produce a fresh buffer via the Pallas copy.
    """
    n = x.shape[0]
    d = math.prod(x.shape[1:]) if x.ndim > 1 else 1
    y = jnp.reshape(x, (n, d))                # zero-copy for contiguous input
    if not materialize:
        return y
    return _materialize_copy(y)


if __name__ == "__main__":
    key = jax.random.PRNGKey(0)

    N, C, H, W = 2, 4, 16, 16
    x = jax.random.normal(key, (N, C, H, W), dtype=jnp.float32)

    # Reference: exactly what the PyTorch module computes.
    ref = x.reshape(N, -1)

    # Default (recommended) path: metadata-only, matches torch .view.
    y_view = flatten(x)

    # Pallas materialization path: runs the copy kernel once.
    y_copy = jax.block_until_ready(flatten(x, materialize=True))

    assert y_copy.shape == (N, C * H * W), y_copy.shape
    assert y_copy.dtype == x.dtype, y_copy.dtype
    assert jnp.array_equal(y_copy, ref)
    assert jnp.array_equal(y_view, ref)

    print("KERNEL_OK")
</pallas_src>

<mosaic_0001>
module attributes {stable_mosaic.version = 11 : i64} {
  func.func @_copy_kernel(%arg0: i32, %arg1: memref<1x2048xf32, #tpu.memory_space<vmem>>, %arg2: memref<1x2048xf32, #tpu.memory_space<vmem>>) attributes {dimension_semantics = [#tpu.dimension_semantics<parallel>], iteration_bounds = array<i64: 1>, scalar_prefetch = 0 : i64, scratch_operands = 0 : i64, tpu.core_type = #tpu.core_type<tc>, window_params = [{transform_indices = @transform_0, window_bounds = array<i64: 1, 2048>}, {transform_indices = @transform_1, window_bounds = array<i64: 1, 2048>}]} {
    %c0 = arith.constant 0 : index
    %c0_0 = arith.constant 0 : index
    %0 = vector.load %arg1[%c0, %c0_0] : memref<1x2048xf32, #tpu.memory_space<vmem>>, vector<1x2048xf32>
    %c0_1 = arith.constant 0 : index
    %c0_2 = arith.constant 0 : index
    %1 = vector.load %arg2[%c0_1, %c0_2] : memref<1x2048xf32, #tpu.memory_space<vmem>>, vector<1x2048xf32>
    tpu.vector_store %arg2[%c0_1, %c0_2], %0 {strides = array<i32>} : memref<1x2048xf32, #tpu.memory_space<vmem>>, vector<1x2048xf32>,
    return
  }
  func.func @transform_0(%arg0: i32) -> (i32, i32) {
    %c0_i32 = arith.constant 0 : i32
    %c0_i32_0 = arith.constant 0 : i32
    return %arg0, %c0_i32 : i32, i32
  }
  func.func @transform_1(%arg0: i32) -> (i32, i32) {
    %c0_i32 = arith.constant 0 : i32
    %c0_i32_0 = arith.constant 0 : i32
    return %arg0, %c0_i32 : i32, i32
  }
}

</mosaic_0001>

<llo_original>
// kernel: tpu_custom_call.1
$region0: #{tpu_custom_call.1}
  #allocation0 [shape = 'u32[]', space=smem, size = 0x4, offset = 0x4, fixed_abs, tag = 'smem constant byte address 0x4 - core index']
  #allocation1 [shape = 'u32[144,128]{1,0:T(1,128)}', space=vmem, size = 0x12000, scoped, tag = 'internal scratch']
  %s0 = inlined_call_operand.hbm [shape: f32[1,2048], index: 0, kind: input, shape index: {}]
  %s1 = inlined_call_operand.hbm [shape: f32[1,2048], index: 1, kind: output, shape index: {}]
  %s2 = sld [smem:[#allocation0]]
  $region18: #{tpu_custom_call.1} parent=0
    _
  %s4 = ssub.s32 1, %s2
  %s5 = scalar_select 0, %s4, %s2
  $region1: #{tpu_custom_call.1} parent=0
    #allocation2 [shape = 'u8[8192]{0}', space=vmem, size = 0x2000, scoped, tag = 'input window, operand 0, single buffered']
    #allocation3 [shape = 's32[1]{0}', space=sflag, size = 0x4, scoped, tag = 'scoped memory for tpu_custom_call.1']
    #allocation4 [shape = 's32[1]{0}', space=sflag, size = 0x4, scoped, tag = 'scoped memory for tpu_custom_call.1']
    #allocation5 [shape = 'u8[8192]{0}', space=vmem, size = 0x2000, scoped, tag = 'output window, operand 0, single buffered']
    %6 = vsyncpa [#allocation3], 0
    %7 = vsyncpa [#allocation4], 0
    // Predicated region
    $region2: #{tpu_custom_call.1} parent=1 // pred_check
      _
    $region3: #{tpu_custom_call.1} parent=1 // pred_check_branch
      %9 = sbr.rel (0) target = $region5
    $region4: #{tpu_custom_call.1} parent=1 // pred_region
      %s11 = ssub.s32 256, 256
      %12 = vsyncadd [#allocation3], %s11
      %s14 = sshll.u32 [#allocation2], 4
      %s15 = int_to_ptr.vmem [resolvable:$true] %s14
      %17 = dma.hbm_to_vmem [thread:$0]  %s0, 256, %s15, [#allocation3]
    $region5: #{tpu_custom_call.1} parent=1 // pred_fallthru
      _
    // Predicated region
    $region6: #{tpu_custom_call.1} parent=1 // pred_check
      _
    $region7: #{tpu_custom_call.1} parent=1 // pred_check_branch
      %19 = sbr.rel (0) target = $region9
    $region8: #{tpu_custom_call.1} parent=1 // pred_region
      %20 = dma.done [#allocation3], 256
    $region9: #{tpu_custom_call.1} parent=1 // pred_fallthru
      _
    %v21 = vld [vmem:[#allocation2] sm:$0xff]
    %v22 = vld [vmem:[#allocation2 + $0x8] sm:$0xff]
    %23 = vst [vmem:[#allocation5] sm:$0xff] %v21
    %24 = vst [vmem:[#allocation5 + $0x8] sm:$0xff] %v22
    // Predicated region
    $region10: #{tpu_custom_call.1} parent=1 // pred_check
      _
    $region11: #{tpu_custom_call.1} parent=1 // pred_check_branch
      %26 = sbr.rel (0) target = $region13
    $region12: #{tpu_custom_call.1} parent=1 // pred_region
      %s28 = ssub.s32 256, 256
      %29 = vsyncadd [#allocation4], %s28
      %s31 = sshll.u32 [#allocation5], 4
      %s32 = int_to_ptr.vmem [resolvable:$true] %s31
      %34 = dma.vmem_to_hbm [thread:$0]  %s32, 256, %s1, [#allocation4]
    $region13: #{tpu_custom_call.1} parent=1 // pred_fallthru
      _
    // Predicated region
    $region14: #{tpu_custom_call.1} parent=1 // pred_check
      _
    $region15: #{tpu_custom_call.1} parent=1 // pred_check_branch
      %36 = sbr.rel (0) target = $region17
    $region16: #{tpu_custom_call.1} parent=1 // pred_region
      %37 = dma.done [#allocation4], 256
    $region17: #{tpu_custom_call.1} parent=1 // pred_fallthru
      _
    %38 = vsyncpa [#allocation3], 1
    %39 = vsyncpa [#allocation4], 1

</llo_original>
